<compile_context>
chip_gen: v7x
topology: tpu7x:2x2x1
jax: 0.10.0
libtpu: 0.0.40
codegen_flags: <defaults>
</compile_context>

<pallas_src>
import functools

import jax
import jax.numpy as jnp
from jax.experimental import pallas as pl
from jax.experimental.pallas import tpu as pltpu


def cnn_classifier_kernel(x_ref, wc_ref, bc_ref, w1_ref, b1_ref, w2_ref, b2_ref, out_ref):
    # x_ref : (TB, Cin*W)        raw flattened input rows (c*W + w order), bf16 or f32
    # wc_ref: (Cin*W, W*Cout)    conv folded into one banded matrix, columns permuted
    #                            [even conv positions | odd conv positions]
    # bc_ref: (1, W*Cout)        conv bias tiled to the permuted column order (f32)
    # w1_ref: (half_w*Cout, 128) fc1 weights regrouped to pooled pos-major (p*Cout+c) rows
    # b1_ref: (1, 128)           (f32)
    # w2_ref: (128, nc_pad)      fc2 weights, lane-padded
    # b2_ref: (1, nc_pad)        (f32)
    # out_ref:(TB, nc_pad)       lane-dense padded logits (bf16 or f32)
    mm_dtype = wc_ref.dtype
    half = w1_ref.shape[0]  # half_w * Cout (= 128 here)

    # ---- Conv2d((1,3), pad (0,1)) + bias + ReLU: ONE lane-dense banded matmul ----
    t = jnp.dot(x_ref[...], wc_ref[...], preferred_element_type=jnp.float32)  # (TB, 2*half)
    t = jnp.maximum(t + bc_ref[...], 0.0)

    # ---- MaxPool2d((1,2)): aligned VPU max of the even/odd halves (no relayout).
    #      Result is already in p*Cout+c order, i.e. what fc1 expects. ----
    pooled = jnp.maximum(t[:, :half], t[:, half:])                             # (TB, 128)

    # ---- fc1 + ReLU ----
    h = jnp.dot(pooled.astype(mm_dtype), w1_ref[...], preferred_element_type=jnp.float32)
    h = jnp.maximum(h + b1_ref[...], 0.0)

    # Dropout(p=0.3): identity in eval/inference mode.
    # TODO(synk): training-mode dropout mask (pltpu.prng_seed / prng_random_bits) not implemented.

    # ---- fc2 into the lane-dense padded output tile ----
    out = jnp.dot(h.astype(mm_dtype), w2_ref[...], preferred_element_type=jnp.float32)
    out_ref[...] = (out + b2_ref[...]).astype(out_ref.dtype)


def _conv_as_banded_matmul_weight(conv_w, W):
    """Fold Conv2d(Cin->Cout, kernel (1,3), padding (0,1)) into a (Cin*W, W*Cout) banded
    matrix acting on the raw row-major (c*W + w) flattened input. Output columns are
    permuted [even conv positions | odd conv positions] so that MaxPool((1,2)) becomes a
    single aligned max between the two halves, already in p*Cout + c order."""
    Cout, Cin, _, K = conv_w.shape
    w_in = jnp.arange(W)[:, None]                 # input position
    w_out = jnp.arange(W)[None, :]                # conv output position
    k = w_in - w_out + 1                          # tap index; valid in [0, K)
    valid = (k >= 0) & (k < K)
    taps = jnp.transpose(conv_w[:, :, 0, :], (2, 1, 0))          # (K, Cin, Cout)
    t = taps[jnp.clip(k, 0, K - 1)]                              # (W_in, W_out, Cin, Cout)
    t = t * valid[:, :, None, None].astype(t.dtype)              # zero-pad handled here
    t = jnp.transpose(t, (2, 0, 1, 3))                           # (Cin, W_in, W_out, Cout)
    perm = jnp.concatenate([jnp.arange(0, W, 2), jnp.arange(1, W, 2)])
    t = t[:, :, perm, :]                                         # even positions first
    return t.reshape(Cin * W, W * Cout)


@functools.partial(jax.jit, static_argnames=("tb", "use_bf16"))
def cnn_classifier_forward(x, params, *, tb=512, use_bf16=True):
    """x: (B, Cin, 1, n_features) float32 (PyTorch NCHW). Returns (B, num_classes) f32."""
    conv_w, conv_b, fc1_w, fc1_b, fc2_w, fc2_b = params
    B, Cin, H, W = x.shape
    assert H == 1 and W % 2 == 0
    Cout = conv_w.shape[0]                       # 16
    hid = fc1_w.shape[0]                         # 128
    nc = fc2_w.shape[0]
    half_w = W // 2
    feat = half_w * Cout                         # fc1 input width (= 128)
    assert fc1_w.shape[1] == feat and fc2_w.shape[1] == hid
    nc_pad = ((nc + 127) // 128) * 128           # lane-dense output width

    # Batch tile: large by default (amortize ~0.35us/grid-step), multiple of 8, but never
    # larger than the (sublane-rounded) batch. For huge B on v7x keep >= 2 blocks so both
    # TensorCores get work via dimension_semantics=("parallel",).
    tb = max(8, (min(tb, ((B + 7) // 8) * 8) // 8) * 8)
    n_blocks = pl.cdiv(B, tb)
    Bp = n_blocks * tb

    mm_dtype = jnp.bfloat16 if use_bf16 else jnp.float32
    out_dtype = jnp.bfloat16 if use_bf16 else jnp.float32

    # ---- wrapper glue: dtype cast first, then layout-only transforms ----
    xflat = x[:, :, 0, :].astype(mm_dtype).reshape(B, Cin * W)   # (B, Cin*W), c*W+w order
    xflat = jnp.pad(xflat, ((0, Bp - B), (0, 0)))

    wc = _conv_as_banded_matmul_weight(conv_w, W).astype(mm_dtype)        # (Cin*W, W*Cout)
    bc = jnp.tile(conv_b, W).reshape(1, W * Cout).astype(jnp.float32)     # col % Cout = c_out
    # PyTorch flatten of (B,16,1,half_w) is c*half_w + p -> regroup rows to p*Cout + c.
    w1 = jnp.transpose(fc1_w.reshape(hid, Cout, half_w), (2, 1, 0)).reshape(feat, hid)
    w1 = w1.astype(mm_dtype)
    b1 = fc1_b.reshape(1, hid).astype(jnp.float32)
    w2 = jnp.pad(fc2_w.T, ((0, 0), (0, nc_pad - nc))).astype(mm_dtype)    # (hid, nc_pad)
    b2 = jnp.pad(fc2_b, (0, nc_pad - nc)).reshape(1, nc_pad).astype(jnp.float32)

    itemsize = jnp.dtype(mm_dtype).itemsize
    flops = 2 * Bp * (Cin * W * W * Cout + feat * hid + hid * nc_pad)
    bytes_accessed = (
        Bp * Cin * W * itemsize
        + Bp * nc_pad * jnp.dtype(out_dtype).itemsize
        + (wc.size + w1.size + w2.size) * itemsize
        + (bc.size + b1.size + b2.size) * 4
    )

    grid_spec = pltpu.PrefetchScalarGridSpec(
        num_scalar_prefetch=0,
        grid=(n_blocks,),
        in_specs=[
            pl.BlockSpec((tb, Cin * W), lambda i: (i, 0)),        # batch-tiled raw input
            pl.BlockSpec((Cin * W, W * Cout), lambda i: (0, 0)),  # weights: VMEM-resident
            pl.BlockSpec((1, W * Cout), lambda i: (0, 0)),
            pl.BlockSpec((feat, hid), lambda i: (0, 0)),
            pl.BlockSpec((1, hid), lambda i: (0, 0)),
            pl.BlockSpec((hid, nc_pad), lambda i: (0, 0)),
            pl.BlockSpec((1, nc_pad), lambda i: (0, 0)),
        ],
        out_specs=pl.BlockSpec((tb, nc_pad), lambda i: (i, 0)),   # lane-dense output tile
    )

    out = pl.pallas_call(
        cnn_classifier_kernel,
        out_shape=jax.ShapeDtypeStruct((Bp, nc_pad), out_dtype),
        grid_spec=grid_spec,
        compiler_params=pltpu.CompilerParams(
            dimension_semantics=("parallel",),     # shard batch tiles across v7x's 2 TCs
            vmem_limit_bytes=32 * 1024 * 1024,     # well under v7x's 64 MiB/TC; plenty here
        ),
        cost_estimate=pl.CostEstimate(
            flops=flops, transcendentals=0, bytes_accessed=bytes_accessed),
    )(xflat, wc, bc, w1, b1, w2, b2)

    return out[:B, :nc].astype(jnp.float32)


def ref_forward(x, params):
    """Pure-JAX reference replicating the PyTorch forward exactly (eval mode)."""
    conv_w, conv_b, fc1_w, fc1_b, fc2_w, fc2_b = params
    B, _, _, W = x.shape
    Cout = conv_w.shape[0]
    hp = jax.lax.Precision.HIGHEST
    y = jax.lax.conv_general_dilated(
        x, conv_w, window_strides=(1, 1), padding=((0, 0), (1, 1)),
        dimension_numbers=("NCHW", "OIHW", "NCHW"), precision=hp)
    y = jnp.maximum(y + conv_b[None, :, None, None], 0.0)
    y = y.reshape(B, Cout, 1, W // 2, 2).max(axis=-1)             # MaxPool2d((1,2))
    flat = y.reshape(B, Cout * (W // 2))                          # x.view(-1, 16*1*(W//2))
    h = jnp.maximum(jnp.dot(flat, fc1_w.T, precision=hp) + fc1_b, 0.0)
    return jnp.dot(h, fc2_w.T, precision=hp) + fc2_b


if __name__ == "__main__":
    B, Cin, n_features, num_classes = 2, 4, 16, 5
    key = jax.random.PRNGKey(0)
    ks = jax.random.split(key, 7)
    conv_w = jax.random.normal(ks[0], (16, Cin, 1, 3), jnp.float32) * 0.1
    conv_b = jax.random.normal(ks[1], (16,), jnp.float32) * 0.1
    fc1_w = jax.random.normal(ks[2], (128, 16 * (n_features // 2)), jnp.float32) * 0.05
    fc1_b = jax.random.normal(ks[3], (128,), jnp.float32) * 0.05
    fc2_w = jax.random.normal(ks[4], (num_classes, 128), jnp.float32) * 0.05
    fc2_b = jax.random.normal(ks[5], (num_classes,), jnp.float32) * 0.05
    params = (conv_w, conv_b, fc1_w, fc1_b, fc2_w, fc2_b)

    x = jax.random.normal(ks[6], (B, Cin, 1, n_features), jnp.float32)

    ref = ref_forward(x, params)

    # f32-operand path: tight agreement with the reference.
    out_f32 = jax.block_until_ready(cnn_classifier_forward(x, params, use_bf16=False))
    assert out_f32.shape == (B, num_classes), out_f32.shape
    assert jnp.allclose(out_f32, ref, atol=5e-3, rtol=5e-3), (out_f32, ref)

    # Default path: bf16 MXU operands + bf16 writeback (f32 accumulation in-kernel).
    out_bf16 = jax.block_until_ready(cnn_classifier_forward(x, params))
    assert out_bf16.shape == (B, num_classes), out_bf16.shape
    assert jnp.allclose(out_bf16, ref, atol=5e-2, rtol=5e-2), (out_bf16, ref)

    print("KERNEL_OK")
</pallas_src>

<mosaic_0001>
module attributes {stable_mosaic.version = 11 : i64} {
  func.func @cnn_classifier_kernel(%arg0: i32, %arg1: memref<8x64xf32, #tpu.memory_space<vmem>>, %arg2: memref<64x256xf32, #tpu.memory_space<vmem>>, %arg3: memref<1x256xf32, #tpu.memory_space<vmem>>, %arg4: memref<128x128xf32, #tpu.memory_space<vmem>>, %arg5: memref<1x128xf32, #tpu.memory_space<vmem>>, %arg6: memref<128x128xf32, #tpu.memory_space<vmem>>, %arg7: memref<1x128xf32, #tpu.memory_space<vmem>>, %arg8: memref<8x128xf32, #tpu.memory_space<vmem>>) attributes {dimension_semantics = [#tpu.dimension_semantics<parallel>], iteration_bounds = array<i64: 1>, scalar_prefetch = 0 : i64, scratch_operands = 0 : i64, tpu.core_type = #tpu.core_type<tc>, window_params = [{transform_indices = @transform_0, window_bounds = array<i64: 8, 64>}, {pipeline_mode = #tpu.pipeline_mode<synchronous>, transform_indices = @transform_1, window_bounds = array<i64: 64, 256>}, {pipeline_mode = #tpu.pipeline_mode<synchronous>, transform_indices = @transform_2, window_bounds = array<i64: 1, 256>}, {pipeline_mode = #tpu.pipeline_mode<synchronous>, transform_indices = @transform_3, window_bounds = array<i64: 128, 128>}, {pipeline_mode = #tpu.pipeline_mode<synchronous>, transform_indices = @transform_4, window_bounds = array<i64: 1, 128>}, {pipeline_mode = #tpu.pipeline_mode<synchronous>, transform_indices = @transform_5, window_bounds = array<i64: 128, 128>}, {pipeline_mode = #tpu.pipeline_mode<synchronous>, transform_indices = @transform_6, window_bounds = array<i64: 1, 128>}, {transform_indices = @transform_7, window_bounds = array<i64: 8, 128>}]} {
    %c0 = arith.constant 0 : index
    %c0_0 = arith.constant 0 : index
    %0 = vector.load %arg1[%c0, %c0_0] : memref<8x64xf32, #tpu.memory_space<vmem>>, vector<8x64xf32>
    %c0_1 = arith.constant 0 : index
    %c0_2 = arith.constant 0 : index
    %1 = vector.load %arg2[%c0_1, %c0_2] : memref<64x256xf32, #tpu.memory_space<vmem>>, vector<64x256xf32>
    %cst = arith.constant dense<0.000000e+00> : vector<8x256xf32>
    %2 = tpu.matmul %0, %1, %cst {dimension_numbers = #tpu.dot_dimension_numbers<[1], [0], [0], [1], [0, 0, 1, 1], [], []>} : vector<8x64xf32>, vector<64x256xf32>, vector<8x256xf32> -> vector<8x256xf32>
    %c0_3 = arith.constant 0 : index
    %c0_4 = arith.constant 0 : index
    %3 = vector.load %arg3[%c0_3, %c0_4] : memref<1x256xf32, #tpu.memory_space<vmem>>, vector<1x256xf32>
    %4 = vector.broadcast %3 : vector<1x256xf32> to vector<8x256xf32>
    %5 = arith.addf %2, %4 : vector<8x256xf32>
    %cst_5 = arith.constant 0.000000e+00 : f32
    %6 = vector.broadcast %cst_5 : f32 to vector<8x256xf32>
    %7 = arith.maximumf %5, %6 : vector<8x256xf32>
    %8 = vector.extract_strided_slice %7 {offsets = [0, 0], sizes = [8, 128], strides = [1, 1]} : vector<8x256xf32> to vector<8x128xf32>
    %9 = vector.extract_strided_slice %7 {offsets = [0, 128], sizes = [8, 128], strides = [1, 1]} : vector<8x256xf32> to vector<8x128xf32>
    %10 = arith.maximumf %8, %9 : vector<8x128xf32>
    %c0_6 = arith.constant 0 : index
    %c0_7 = arith.constant 0 : index
    %11 = vector.load %arg4[%c0_6, %c0_7] : memref<128x128xf32, #tpu.memory_space<vmem>>, vector<128x128xf32>
    %cst_8 = arith.constant dense<0.000000e+00> : vector<8x128xf32>
    %12 = tpu.matmul %10, %11, %cst_8 {dimension_numbers = #tpu.dot_dimension_numbers<[1], [0], [0], [1], [0, 0, 1, 1], [], []>} : vector<8x128xf32>, vector<128x128xf32>, vector<8x128xf32> -> vector<8x128xf32>
    %c0_9 = arith.constant 0 : index
    %c0_10 = arith.constant 0 : index
    %13 = vector.load %arg5[%c0_9, %c0_10] : memref<1x128xf32, #tpu.memory_space<vmem>>, vector<1x128xf32>
    %14 = vector.broadcast %13 : vector<1x128xf32> to vector<8x128xf32>
    %15 = arith.addf %12, %14 : vector<8x128xf32>
    %cst_11 = arith.constant 0.000000e+00 : f32
    %16 = vector.broadcast %cst_11 : f32 to vector<8x128xf32>
    %17 = arith.maximumf %15, %16 : vector<8x128xf32>
    %c0_12 = arith.constant 0 : index
    %c0_13 = arith.constant 0 : index
    %18 = vector.load %arg6[%c0_12, %c0_13] : memref<128x128xf32, #tpu.memory_space<vmem>>, vector<128x128xf32>
    %cst_14 = arith.constant dense<0.000000e+00> : vector<8x128xf32>
    %19 = tpu.matmul %17, %18, %cst_14 {dimension_numbers = #tpu.dot_dimension_numbers<[1], [0], [0], [1], [0, 0, 1, 1], [], []>} : vector<8x128xf32>, vector<128x128xf32>, vector<8x128xf32> -> vector<8x128xf32>
    %c0_15 = arith.constant 0 : index
    %c0_16 = arith.constant 0 : index
    %20 = vector.load %arg7[%c0_15, %c0_16] : memref<1x128xf32, #tpu.memory_space<vmem>>, vector<1x128xf32>
    %21 = vector.broadcast %20 : vector<1x128xf32> to vector<8x128xf32>
    %22 = arith.addf %19, %21 : vector<8x128xf32>
    %c0_17 = arith.constant 0 : index
    %c0_18 = arith.constant 0 : index
    %23 = vector.load %arg8[%c0_17, %c0_18] : memref<8x128xf32, #tpu.memory_space<vmem>>, vector<8x128xf32>
    tpu.vector_store %arg8[%c0_17, %c0_18], %22 {strides = array<i32>} : memref<8x128xf32, #tpu.memory_space<vmem>>, vector<8x128xf32>,
    return
  }
  func.func @transform_0(%arg0: i32) -> (i32, i32) {
    %c0_i32 = arith.constant 0 : i32
    %c0_i32_0 = arith.constant 0 : i32
    return %arg0, %c0_i32 : i32, i32
  }
  func.func @transform_1(%arg0: i32) -> (i32, i32) {
    %c0_i32 = arith.constant 0 : i32
    %c0_i32_0 = arith.constant 0 : i32
    %c0_i32_1 = arith.constant 0 : i32
    return %c0_i32, %c0_i32_0 : i32, i32
  }
  func.func @transform_2(%arg0: i32) -> (i32, i32) {
    %c0_i32 = arith.constant 0 : i32
    %c0_i32_0 = arith.constant 0 : i32
    %c0_i32_1 = arith.constant 0 : i32
    return %c0_i32, %c0_i32_0 : i32, i32
  }
  func.func @transform_3(%arg0: i32) -> (i32, i32) {
    %c0_i32 = arith.constant 0 : i32
    %c0_i32_0 = arith.constant 0 : i32
    %c0_i32_1 = arith.constant 0 : i32
    return %c0_i32, %c0_i32_0 : i32, i32
  }
  func.func @transform_4(%arg0: i32) -> (i32, i32) {
    %c0_i32 = arith.constant 0 : i32
    %c0_i32_0 = arith.constant 0 : i32
    %c0_i32_1 = arith.constant 0 : i32
    return %c0_i32, %c0_i32_0 : i32, i32
  }
  func.func @transform_5(%arg0: i32) -> (i32, i32) {
    %c0_i32 = arith.constant 0 : i32
    %c0_i32_0 = arith.constant 0 : i32
    %c0_i32_1 = arith.constant 0 : i32
    return %c0_i32, %c0_i32_0 : i32, i32
  }
  func.func @transform_6(%arg0: i32) -> (i32, i32) {
    %c0_i32 = arith.constant 0 : i32
    %c0_i32_0 = arith.constant 0 : i32
    %c0_i32_1 = arith.constant 0 : i32
    return %c0_i32, %c0_i32_0 : i32, i32
  }
  func.func @transform_7(%arg0: i32) -> (i32, i32) {
    %c0_i32 = arith.constant 0 : i32
    %c0_i32_0 = arith.constant 0 : i32
    return %arg0, %c0_i32 : i32, i32
  }
}

</mosaic_0001>

<llo_original>
// kernel: squeeze.2
$region0: #{squeeze.2}
  %s0 = inlined_call_operand.vmem [shape: f32[2,4,16], index: 0, kind: input, shape index: {}]
  %s1 = inlined_call_operand.vmem [shape: f32[2,64], index: 1, kind: output, shape index: {}]
  $region1: #{squeeze.2} parent=0
    #allocation0 [shape = 'u8[4096]{0}', space=vmem, size = 0x1000, scoped, tag = 'scoped mem for output reshape']
    #allocation1 [shape = 'u8[8192]{0}', space=vmem, size = 0x2000, scoped, tag = 'scoped mem for input reshape']
    %s3 = sshllo.u32 0, 4
    %s4 = scalar_lea.vmem %s0, 4
    %v5 = vld [vmem:[%s4] sm:%s3]
    %s6 = scalar_lea.vmem [#allocation1], 8
    %7 = vst [vmem:[%s6] sm:%s3] %v5
    %v8 = vld [vmem:[%s0] sm:%s3]
    %9 = vst [vmem:[#allocation1] sm:%s3] %v8
    %s10 = smov 3
    %v11 = vld [vmem:[#allocation1] ss:$8 sm:%s10]
    %vm12 = vcmask 130048
    %13 = vst.msk [vmem:[#allocation0] sm:$0x3] %vm12, %v11
    %s14 = scalar_lea.vmem [#allocation1], 3
    %s15 = smov 3
    %v16 = vld [vmem:[%s14] ss:$8 sm:%s15]
    %17 = vrot.lane.b32.xlu0 %v16, 48
    %v18 = vpop.permute.xlu0 %17
    %vm19 = vcmask 523648
    %20 = vst.msk [vmem:[#allocation0] sm:$0x3] %vm19, %v18
    %s21 = scalar_lea.vmem [#allocation1], 2
    %s22 = smov 3
    %v23 = vld [vmem:[%s21] ss:$8 sm:%s22]
    %24 = vrot.lane.b32.xlu0 %v23, 32
    %v25 = vpop.permute.xlu0 %24
    %vm26 = vcmask 392448
    %27 = vst.msk [vmem:[#allocation0] sm:$0x3] %vm26, %v25
    %s28 = scalar_lea.vmem [#allocation1], 1
    %s29 = smov 3
    %v30 = vld [vmem:[%s28] ss:$8 sm:%s29]
    %31 = vrot.lane.b32.xlu0 %v30, 16
    %v32 = vpop.permute.xlu0 %31
    %vm33 = vcmask 261248
    %34 = vst.msk [vmem:[#allocation0] sm:$0x3] %vm33, %v32
    %s36 = sshllo.u32 0, 2
    %v38 = vld [vmem:[#allocation0] sm:%s36]
    %s39 = sshllo.u32 0, 2
    %40 = vst [vmem:[%s1] sm:%s39] %v38

// kernel: tile.8
$region0: #{tile.8}
  #allocation0 [shape = 's32[1]{0}', space=sflag, size = 0x4, scoped, tag = 'scoped memory for tile.8']
  %s0 = inlined_call_operand.vmem [shape: f32[16], index: 0, kind: input, shape index: {}]
  %s1 = inlined_call_operand.vmem [shape: f32[16,16], index: 1, kind: output, shape index: {}]
  // Predicated region
  $region2: #{tile.8} parent=0 // pred_check
    _
  $region3: #{tile.8} parent=0 // pred_check_branch
    %3 = sbr.rel (0) target = $region5
  $region4: #{tile.8} parent=0 // pred_region
    _
  $region5: #{tile.8} parent=0 // pred_fallthru
    _
  %v4 = vld [vmem:[%s0] ss:$0 sm:$0xff]
  %5 = vst [vmem:[%s1] sm:$0xff] %v4
  %s6 = scalar_lea.vmem %s1, 8
  %7 = vst [vmem:[%s6] sm:$0xff] %v4

// kernel: tile.9
$region0: #{tile.9}
  %s0 = inlined_call_operand.vmem [shape: f32[16,16], index: 0, kind: input, shape index: {}]
  %s1 = inlined_call_operand.vmem [shape: f32[1,256], index: 1, kind: output, shape index: {}]
  $region1: #{tile.9} parent=0
    #allocation0 [shape = 'u8[8192]{0}', space=vmem, size = 0x2000, scoped, tag = 'scoped mem for output reshape']
    %s2 = smov 3
    %v3 = vld [vmem:[%s0] ss:$8 sm:%s2]
    %vm4 = vcmask 130048
    %5 = vst.msk [vmem:[#allocation0] ss:$8 sm:$0x3] %vm4, %v3
    %s6 = scalar_lea.vmem %s0, 7
    %s7 = smov 3
    %v8 = vld [vmem:[%s6] ss:$8 sm:%s7]
    %9 = vrot.lane.b32.xlu0 %v8, 112
    %v10 = vpop.permute.xlu0 %9
    %vm11 = vcmask 1048448
    %12 = vst.msk [vmem:[#allocation0] ss:$8 sm:$0x3] %vm11, %v10
    %s13 = scalar_lea.vmem %s0, 6
    %s14 = smov 3
    %v15 = vld [vmem:[%s13] ss:$8 sm:%s14]
    %16 = vrot.lane.b32.xlu0 %v15, 96
    %v17 = vpop.permute.xlu0 %16
    %vm18 = vcmask 917248
    %19 = vst.msk [vmem:[#allocation0] ss:$8 sm:$0x3] %vm18, %v17
    %s20 = scalar_lea.vmem %s0, 5
    %s21 = smov 3
    %v22 = vld [vmem:[%s20] ss:$8 sm:%s21]
    %23 = vrot.lane.b32.xlu0 %v22, 80
    %v24 = vpop.permute.xlu0 %23
    %vm25 = vcmask 786048
    %26 = vst.msk [vmem:[#allocation0] ss:$8 sm:$0x3] %vm25, %v24
    %s27 = scalar_lea.vmem %s0, 4
    %s28 = smov 3
    %v29 = vld [vmem:[%s27] ss:$8 sm:%s28]
    %30 = vrot.lane.b32.xlu0 %v29, 64
    %v31 = vpop.permute.xlu0 %30
    %vm32 = vcmask 654848
    %33 = vst.msk [vmem:[#allocation0] ss:$8 sm:$0x3] %vm32, %v31
    %s34 = scalar_lea.vmem %s0, 3
    %s35 = smov 3
    %v36 = vld [vmem:[%s34] ss:$8 sm:%s35]
    %37 = vrot.lane.b32.xlu0 %v36, 48
    %v38 = vpop.permute.xlu0 %37
    %vm39 = vcmask 523648
    %40 = vst.msk [vmem:[#allocation0] ss:$8 sm:$0x3] %vm39, %v38
    %s41 = scalar_lea.vmem %s0, 2
    %s42 = smov 3
    %v43 = vld [vmem:[%s41] ss:$8 sm:%s42]
    %44 = vrot.lane.b32.xlu0 %v43, 32
    %v45 = vpop.permute.xlu0 %44
    %vm46 = vcmask 392448
    %47 = vst.msk [vmem:[#allocation0] ss:$8 sm:$0x3] %vm46, %v45
    %s48 = scalar_lea.vmem %s0, 1
    %s49 = smov 3
    %v50 = vld [vmem:[%s48] ss:$8 sm:%s49]
    %51 = vrot.lane.b32.xlu0 %v50, 16
    %v52 = vpop.permute.xlu0 %51
    %vm53 = vcmask 261248
    %54 = vst.msk [vmem:[#allocation0] ss:$8 sm:$0x3] %vm53, %v52
    %s56 = sshllo.u32 0, 1
    %v58 = vld [vmem:[#allocation0] sm:%s56]
    %s59 = sshllo.u32 0, 1
    %60 = vst [vmem:[%s1] sm:%s59] %v58
    %s61 = scalar_lea.vmem [#allocation0], 8
    %v62 = vld [vmem:[%s61] sm:%s56]
    %s63 = sshllo.u32 0, 1
    %s64 = scalar_lea.vmem %s1, 1
    %65 = vst [vmem:[%s64] sm:%s63] %v62

// kernel: cnn_classifier_forward.1
$region0: #{cnn_classifier_forward.1}
  #allocation0 [shape = 'u32[]', space=smem, size = 0x4, offset = 0x4, fixed_abs, tag = 'smem constant byte address 0x4 - core index']
  #allocation1 [shape = 'u32[144,128]{1,0:T(1,128)}', space=vmem, size = 0x12000, scoped, tag = 'internal scratch']
  %s0 = inlined_call_operand.vmem [shape: f32[8,64], index: 0, kind: input, shape index: {}]
  %s1 = inlined_call_operand.vmem [shape: f32[64,256], index: 1, kind: input, shape index: {}]
  %s2 = inlined_call_operand.vmem [shape: f32[1,256], index: 2, kind: input, shape index: {}]
  %s3 = inlined_call_operand.vmem [shape: f32[128,128], index: 3, kind: input, shape index: {}]
  %s4 = inlined_call_operand.vmem [shape: f32[1,128], index: 4, kind: input, shape index: {}]
  %s5 = inlined_call_operand.vmem [shape: f32[128,128], index: 5, kind: input, shape index: {}]
  %s6 = inlined_call_operand.vmem [shape: f32[1,128], index: 6, kind: input, shape index: {}]
  %s7 = inlined_call_operand.vmem [shape: f32[8,128], index: 7, kind: output, shape index: {}]
  %s8 = sld [smem:[#allocation0]]
  $region38: #{cnn_classifier_forward.1} parent=0
    _
  %s10 = ssub.s32 1, %s8
  %s11 = scalar_select 0, %s10, %s8
  // Predicated region
  $region2: #{cnn_classifier_forward.1} parent=0 // pred_check
    _
  $region3: #{cnn_classifier_forward.1} parent=0 // pred_check_branch
    %13 = sbr.rel (0) target = $region5
  $region4: #{cnn_classifier_forward.1} parent=0 // pred_region
    _
  $region5: #{cnn_classifier_forward.1} parent=0 // pred_fallthru
    _
  // Predicated region
  $region6: #{cnn_classifier_forward.1} parent=0 // pred_check
    _
  $region7: #{cnn_classifier_forward.1} parent=0 // pred_check_branch
    %15 = sbr.rel (0) target = $region9
  $region8: #{cnn_classifier_forward.1} parent=0 // pred_region
    _
  $region9: #{cnn_classifier_forward.1} parent=0 // pred_fallthru
    _
  // Predicated region
  $region10: #{cnn_classifier_forward.1} parent=0 // pred_check
    _
  $region11: #{cnn_classifier_forward.1} parent=0 // pred_check_branch
    %17 = sbr.rel (0) target = $region13
  $region12: #{cnn_classifier_forward.1} parent=0 // pred_region
    _
  $region13: #{cnn_classifier_forward.1} parent=0 // pred_fallthru
    _
  // Predicated region
  $region14: #{cnn_classifier_forward.1} parent=0 // pred_check
    _
  $region15: #{cnn_classifier_forward.1} parent=0 // pred_check_branch
    %19 = sbr.rel (0) target = $region17
  $region16: #{cnn_classifier_forward.1} parent=0 // pred_region
    _
  $region17: #{cnn_classifier_forward.1} parent=0 // pred_fallthru
    _
  // Predicated region
  $region18: #{cnn_classifier_forward.1} parent=0 // pred_check
    _
  $region19: #{cnn_classifier_forward.1} parent=0 // pred_check_branch
    %21 = sbr.rel (0) target = $region21
  $region20: #{cnn_classifier_forward.1} parent=0 // pred_region
    _
  $region21: #{cnn_classifier_forward.1} parent=0 // pred_fallthru
    _
  // Predicated region
  $region22: #{cnn_classifier_forward.1} parent=0 // pred_check
    _
  $region23: #{cnn_classifier_forward.1} parent=0 // pred_check_branch
    %23 = sbr.rel (0) target = $region25
  $region24: #{cnn_classifier_forward.1} parent=0 // pred_region
    _
  $region25: #{cnn_classifier_forward.1} parent=0 // pred_fallthru
    _
  // Predicated region
  $region26: #{cnn_classifier_forward.1} parent=0 // pred_check
    _
  $region27: #{cnn_classifier_forward.1} parent=0 // pred_check_branch
    %25 = sbr.rel (0) target = $region29
  $region28: #{cnn_classifier_forward.1} parent=0 // pred_region
    _
  $region29: #{cnn_classifier_forward.1} parent=0 // pred_fallthru
    _
  %v26 = vld [vmem:[%s0] sm:$0xff]
  %v27 = vld [vmem:[%s1] sm:$0xff]
  %v28 = vld [vmem:[%s1 + $0x8] sm:$0xff]
  %v29 = vld [vmem:[%s1 + $0x10] sm:$0xff]
  %v30 = vld [vmem:[%s1 + $0x18] sm:$0xff]
  %v31 = vld [vmem:[%s1 + $0x20] sm:$0xff]
  %v32 = vld [vmem:[%s1 + $0x28] sm:$0xff]
  %v33 = vld [vmem:[%s1 + $0x30] sm:$0xff]
  %v34 = vld [vmem:[%s1 + $0x38] sm:$0xff]
  %v35 = vld [vmem:[%s1 + $0x40] sm:$0xff]
  %v36 = vld [vmem:[%s1 + $0x48] sm:$0xff]
  %v37 = vld [vmem:[%s1 + $0x50] sm:$0xff]
  %v38 = vld [vmem:[%s1 + $0x58] sm:$0xff]
  %v39 = vld [vmem:[%s1 + $0x60] sm:$0xff]
  %v40 = vld [vmem:[%s1 + $0x68] sm:$0xff]
  %v41 = vld [vmem:[%s1 + $0x70] sm:$0xff]
  %v42 = vld [vmem:[%s1 + $0x78] sm:$0xff]
  %v43 = vld [vmem:[%s2] sm:$0x3]
  %v45 = vlaneseq
  %v46 = vshrl.u32 %v45, 7
  %v47 = vsub.s32 0, %v46
  %v48 = vrot.slane %v43, %v47
  %v49 = vlaneseq
  %v50 = vshrl.u32 %v49, 7
  %v51 = vsub.s32 1, %v50
  %v52 = vrot.slane %v43, %v51
  %vm55 = vcmask 523264
  %v57 = vsel %vm55, %v26, 0
  %59 = vmatprep.subr.mxu0 %v28
  %60 = vmatpush1.msra.mxu0 %v27
  %61 = vmatprep.subr.mxu0 %v30
  %62 = vmatpush1.msra.mxu0 %v29
  %63 = vmatprep.subr.mxu0 %v32
  %64 = vmatpush1.msra.mxu0 %v31
  %65 = vmatprep.subr.mxu0 %v34
  %66 = vmatpush1.msra.mxu0 %v33
  %67 = vmatprep.subr.mxu0 %v36
  %68 = vmatpush1.msra.mxu0 %v35
  %69 = vmatprep.subr.mxu0 %v38
  %70 = vmatpush1.msra.mxu0 %v37
  %71 = vmatprep.subr.mxu0 %v40
  %72 = vmatpush1.msra.mxu0 %v39
  %73 = vmatprep.subr.mxu0 %v42
  %74 = vmatpush1.msra.mxu0 %v41
  %75 = vmatprep.subr.mxu0 0.0
  %76 = vmatpush1.msra.mxu0 0.0
  %77 = vmatprep.subr.mxu0 0.0
  %78 = vmatpush1.msra.mxu0 0.0
  %79 = vmatprep.subr.mxu0 0.0
  %80 = vmatpush1.msra.mxu0 0.0
  %81 = vmatprep.subr.mxu0 0.0
  %82 = vmatpush1.msra.mxu0 0.0
  %83 = vmatprep.subr.mxu0 0.0
  %84 = vmatpush1.msra.mxu0 0.0
  %85 = vmatprep.subr.mxu0 0.0
  %86 = vmatpush1.msra.mxu0 0.0
  %87 = vmatprep.subr.mxu0 0.0
  %88 = vmatpush1.msra.mxu0 0.0
  %89 = vmatprep.subr.mxu0 0.0
  %90 = vmatpush1.msra.mxu0 0.0
  %91 = vmatprep.subr.mxu0 0.0
  %92 = vmatpush1.msra.mxu0 0.0
  %93 = vmatprep.subr.mxu0 0.0
  %94 = vmatpush1.msra.mxu0 0.0
  %95 = vmatprep.subr.mxu0 0.0
  %96 = vmatpush1.msra.mxu0 0.0
  %97 = vmatprep.subr.mxu0 0.0
  %98 = vmatpush1.msra.mxu0 0.0
  %99 = vmatprep.subr.mxu0 0.0
  %100 = vmatpush1.msra.mxu0 0.0
  %101 = vmatprep.subr.mxu0 0.0
  %102 = vmatpush1.msra.mxu0 0.0
  %103 = vmatprep.subr.mxu0 0.0
  %104 = vmatpush1.msra.mxu0 0.0
  %105 = vmatprep.subr.mxu0 0.0
  %106 = vmatpush1.msra.mxu0 0.0
  %107 = vmatprep.subr.mxu0 0.0
  %108 = vmatpush1.msra.mxu0 0.0
  %109 = vmatprep.subr.mxu0 0.0
  %110 = vmatpush1.msra.mxu0 0.0
  %111 = vmatprep.subr.mxu0 0.0
  %112 = vmatpush1.msra.mxu0 0.0
  %113 = vmatprep.subr.mxu0 0.0
  %114 = vmatpush1.msra.mxu0 0.0
  %115 = vmatprep.subr.mxu0 0.0
  %116 = vmatpush1.msra.mxu0 0.0
  %117 = vmatprep.subr.mxu0 0.0
  %118 = vmatpush1.msra.mxu0 0.0
  %119 = vmatprep.subr.mxu0 0.0
  %120 = vmatpush1.msra.mxu0 0.0
  %121 = vmatprep.subr.mxu0 0.0
  %122 = vmatpush1.msra.mxu0 0.0
  %123 = vmatprep.mubr.f32.mxu0 0.0
  %124 = vmatmul.mubr.f32.gmra.mrb[0].mxu0 %v57
  %v125 = vpop.f32.mrb[0].mxu0
  %v126 = vadd.f32 %v48, %v125
  %v127 = vpop.f32.mrb[0].mxu0
  %v128 = vadd.f32 %v52, %v127
  %129 = vdwg.mxu0
  %v130 = vmax.f32 %v126, 0.0
  %v131 = vmax.f32 %v128, 0.0
  %v132 = vmax.f32 %v130, %v131
  %v133 = vld [vmem:[%s3] sm:$0xff]
  %v134 = vld [vmem:[%s3 + $0x8] sm:$0xff]
  %v135 = vld [vmem:[%s3 + $0x10] sm:$0xff]
  %v136 = vld [vmem:[%s3 + $0x18] sm:$0xff]
  %v137 = vld [vmem:[%s3 + $0x20] sm:$0xff]
  %v138 = vld [vmem:[%s3 + $0x28] sm:$0xff]
  %v139 = vld [vmem:[%s3 + $0x30] sm:$0xff]
  %v140 = vld [vmem:[%s3 + $0x38] sm:$0xff]
  %v141 = vld [vmem:[%s3 + $0x40] sm:$0xff]
  %v142 = vld [vmem:[%s3 + $0x48] sm:$0xff]
  %v143 = vld [vmem:[%s3 + $0x50] sm:$0xff]
  %v144 = vld [vmem:[%s3 + $0x58] sm:$0xff]
  %v145 = vld [vmem:[%s3 + $0x60] sm:$0xff]
  %v146 = vld [vmem:[%s3 + $0x68] sm:$0xff]
  %v147 = vld [vmem:[%s3 + $0x70] sm:$0xff]
  %v148 = vld [vmem:[%s3 + $0x78] sm:$0xff]
  %v149 = vld [vmem:[%s4] sm:$0x1]
  %v151 = vlaneseq
  %v152 = vshrl.u32 %v151, 7
  %v153 = vsub.s32 0, %v152
  %v154 = vrot.slane %v149, %v153
  %156 = vmatprep.subr.mxu0 0.0
  %157 = vmatpush1.msra.mxu0 %v133
  %158 = vmatprep.subr.mxu0 0.0
  %159 = vmatpush1.msra.mxu0 %v134
  %160 = vmatprep.subr.mxu0 0.0
  %161 = vmatpush1.msra.mxu0 %v135
  %162 = vmatprep.subr.mxu0 0.0
  %163 = vmatpush1.msra.mxu0 %v136
  %164 = vmatprep.subr.mxu0 0.0
  %165 = vmatpush1.msra.mxu0 %v137
  %166 = vmatprep.subr.mxu0 0.0
  %167 = vmatpush1.msra.mxu0 %v138
  %168 = vmatprep.subr.mxu0 0.0
  %169 = vmatpush1.msra.mxu0 %v139
  %170 = vmatprep.subr.mxu0 0.0
  %171 = vmatpush1.msra.mxu0 %v140
  %172 = vmatprep.subr.mxu0 0.0
  %173 = vmatpush1.msra.mxu0 %v141
  %174 = vmatprep.subr.mxu0 0.0
  %175 = vmatpush1.msra.mxu0 %v142
  %176 = vmatprep.subr.mxu0 0.0
  %177 = vmatpush1.msra.mxu0 %v143
  %178 = vmatprep.subr.mxu0 0.0
  %179 = vmatpush1.msra.mxu0 %v144
  %180 = vmatprep.subr.mxu0 0.0
  %181 = vmatpush1.msra.mxu0 %v145
  %182 = vmatprep.subr.mxu0 0.0
  %183 = vmatpush1.msra.mxu0 %v146
  %184 = vmatprep.subr.mxu0 0.0
  %185 = vmatpush1.msra.mxu0 %v147
  %186 = vmatprep.subr.mxu0 0.0
  %187 = vmatpush1.msra.mxu0 %v148
  %188 = vmatprep.subr.mxu0 0.0
  %189 = vmatpush1.msra.mxu0 0.0
  %190 = vmatprep.subr.mxu0 0.0
  %191 = vmatpush1.msra.mxu0 0.0
  %192 = vmatprep.subr.mxu0 0.0
  %193 = vmatpush1.msra.mxu0 0.0
  %194 = vmatprep.subr.mxu0 0.0
  %195 = vmatpush1.msra.mxu0 0.0
  %196 = vmatprep.subr.mxu0 0.0
  %197 = vmatpush1.msra.mxu0 0.0
  %198 = vmatprep.subr.mxu0 0.0
  %199 = vmatpush1.msra.mxu0 0.0
  %200 = vmatprep.subr.mxu0 0.0
  %201 = vmatpush1.msra.mxu0 0.0
  %202 = vmatprep.subr.mxu0 0.0
  %203 = vmatpush1.msra.mxu0 0.0
  %204 = vmatprep.subr.mxu0 0.0
  %205 = vmatpush1.msra.mxu0 0.0
  %206 = vmatprep.subr.mxu0 0.0
  %207 = vmatpush1.msra.mxu0 0.0
  %208 = vmatprep.subr.mxu0 0.0
  %209 = vmatpush1.msra.mxu0 0.0
  %210 = vmatprep.subr.mxu0 0.0
  %211 = vmatpush1.msra.mxu0 0.0
  %212 = vmatprep.subr.mxu0 0.0
  %213 = vmatpush1.msra.mxu0 0.0
  %214 = vmatprep.subr.mxu0 0.0
  %215 = vmatpush1.msra.mxu0 0.0
  %216 = vmatprep.subr.mxu0 0.0
  %217 = vmatpush1.msra.mxu0 0.0
  %218 = vmatprep.subr.mxu0 0.0
  %219 = vmatpush1.msra.mxu0 0.0
  %220 = vmatprep.mubr.f32.mxu0 0.0
  %221 = vmatmul.mubr.f32.gmra.mrb[0].mxu0 %v132
  %v222 = vpop.f32.mrb[0].mxu0
  %v223 = vadd.f32 %v154, %v222
  %v224 = vpop.f32.mrb[0].mxu0
  %225 = vdwg.mxu0
  %v226 = vmax.f32 %v223, 0.0
  %v227 = vld [vmem:[%s5] sm:$0xff]
  %v228 = vld [vmem:[%s5 + $0x8] sm:$0xff]
  %v229 = vld [vmem:[%s5 + $0x10] sm:$0xff]
  %v230 = vld [vmem:[%s5 + $0x18] sm:$0xff]
  %v231 = vld [vmem:[%s5 + $0x20] sm:$0xff]
  %v232 = vld [vmem:[%s5 + $0x28] sm:$0xff]
  %v233 = vld [vmem:[%s5 + $0x30] sm:$0xff]
  %v234 = vld [vmem:[%s5 + $0x38] sm:$0xff]
  %v235 = vld [vmem:[%s5 + $0x40] sm:$0xff]
  %v236 = vld [vmem:[%s5 + $0x48] sm:$0xff]
  %v237 = vld [vmem:[%s5 + $0x50] sm:$0xff]
  %v238 = vld [vmem:[%s5 + $0x58] sm:$0xff]
  %v239 = vld [vmem:[%s5 + $0x60] sm:$0xff]
  %v240 = vld [vmem:[%s5 + $0x68] sm:$0xff]
  %v241 = vld [vmem:[%s5 + $0x70] sm:$0xff]
  %v242 = vld [vmem:[%s5 + $0x78] sm:$0xff]
  %v243 = vld [vmem:[%s6] sm:$0x1]
  %v245 = vlaneseq
  %v246 = vshrl.u32 %v245, 7
  %v247 = vsub.s32 0, %v246
  %v248 = vrot.slane %v243, %v247
  %250 = vmatprep.subr.mxu0 0.0
  %251 = vmatpush1.msra.mxu0 %v227
  %252 = vmatprep.subr.mxu0 0.0
  %253 = vmatpush1.msra.mxu0 %v228
  %254 = vmatprep.subr.mxu0 0.0
  %255 = vmatpush1.msra.mxu0 %v229
  %256 = vmatprep.subr.mxu0 0.0
  %257 = vmatpush1.msra.mxu0 %v230
  %258 = vmatprep.subr.mxu0 0.0
  %259 = vmatpush1.msra.mxu0 %v231
  %260 = vmatprep.subr.mxu0 0.0
  %261 = vmatpush1.msra.mxu0 %v232
  %262 = vmatprep.subr.mxu0 0.0
  %263 = vmatpush1.msra.mxu0 %v233
  %264 = vmatprep.subr.mxu0 0.0
  %265 = vmatpush1.msra.mxu0 %v234
  %266 = vmatprep.subr.mxu0 0.0
  %267 = vmatpush1.msra.mxu0 %v235
  %268 = vmatprep.subr.mxu0 0.0
  %269 = vmatpush1.msra.mxu0 %v236
  %270 = vmatprep.subr.mxu0 0.0
  %271 = vmatpush1.msra.mxu0 %v237
  %272 = vmatprep.subr.mxu0 0.0
  %273 = vmatpush1.msra.mxu0 %v238
  %274 = vmatprep.subr.mxu0 0.0
  %275 = vmatpush1.msra.mxu0 %v239
  %276 = vmatprep.subr.mxu0 0.0
  %277 = vmatpush1.msra.mxu0 %v240
  %278 = vmatprep.subr.mxu0 0.0
  %279 = vmatpush1.msra.mxu0 %v241
  %280 = vmatprep.subr.mxu0 0.0
  %281 = vmatpush1.msra.mxu0 %v242
  %282 = vmatprep.subr.mxu0 0.0
  %283 = vmatpush1.msra.mxu0 0.0
  %284 = vmatprep.subr.mxu0 0.0
  %285 = vmatpush1.msra.mxu0 0.0
  %286 = vmatprep.subr.mxu0 0.0
  %287 = vmatpush1.msra.mxu0 0.0
  %288 = vmatprep.subr.mxu0 0.0
  %289 = vmatpush1.msra.mxu0 0.0
  %290 = vmatprep.subr.mxu0 0.0
  %291 = vmatpush1.msra.mxu0 0.0
  %292 = vmatprep.subr.mxu0 0.0
  %293 = vmatpush1.msra.mxu0 0.0
  %294 = vmatprep.subr.mxu0 0.0
  %295 = vmatpush1.msra.mxu0 0.0
  %296 = vmatprep.subr.mxu0 0.0
  %297 = vmatpush1.msra.mxu0 0.0
  %298 = vmatprep.subr.mxu0 0.0
  %299 = vmatpush1.msra.mxu0 0.0
  %300 = vmatprep.subr.mxu0 0.0
  %301 = vmatpush1.msra.mxu0 0.0
  %302 = vmatprep.subr.mxu0 0.0
  %303 = vmatpush1.msra.mxu0 0.0
  %304 = vmatprep.subr.mxu0 0.0
  %305 = vmatpush1.msra.mxu0 0.0
  %306 = vmatprep.subr.mxu0 0.0
  %307 = vmatpush1.msra.mxu0 0.0
  %308 = vmatprep.subr.mxu0 0.0
  %309 = vmatpush1.msra.mxu0 0.0
  %310 = vmatprep.subr.mxu0 0.0
  %311 = vmatpush1.msra.mxu0 0.0
  %312 = vmatprep.subr.mxu0 0.0
  %313 = vmatpush1.msra.mxu0 0.0
  %314 = vmatprep.mubr.f32.mxu0 0.0
  %315 = vmatmul.mubr.f32.gmra.mrb[0].mxu0 %v226
  %v316 = vpop.f32.mrb[0].mxu0
  %v317 = vadd.f32 %v248, %v316
  %v318 = vpop.f32.mrb[0].mxu0
  %319 = vdwg.mxu0
  %320 = vst [vmem:[%s7] sm:$0xff] %v317
  // Predicated region
  $region30: #{cnn_classifier_forward.1} parent=0 // pred_check
    _
  $region31: #{cnn_classifier_forward.1} parent=0 // pred_check_branch
    %322 = sbr.rel (0) target = $region33
  $region32: #{cnn_classifier_forward.1} parent=0 // pred_region
    _
  $region33: #{cnn_classifier_forward.1} parent=0 // pred_fallthru
    _
  // Predicated region
  $region34: #{cnn_classifier_forward.1} parent=0 // pred_check
    _
  $region35: #{cnn_classifier_forward.1} parent=0 // pred_check_branch
    %324 = sbr.rel (0) target = $region37
  $region36: #{cnn_classifier_forward.1} parent=0 // pred_region
    _
  $region37: #{cnn_classifier_forward.1} parent=0 // pred_fallthru
    _

</llo_original>
